<compile_context>
chip_gen: v7x
topology: tpu7x:2x2x1
jax: 0.10.0
libtpu: 0.0.40
codegen_flags: <defaults>
</compile_context>

<pallas_src>
import functools

import jax
import jax.numpy as jnp
from jax.experimental import pallas as pl
from jax.experimental.pallas import tpu as pltpu

# ----------------------------- problem sizes --------------------------------
N_M = 16          # number of "m" nodes
N_D = 16          # number of "d" nodes
N   = N_M + N_D   # total nodes
DIM = 32          # embedding dim
HID = 32          # MLP hidden dim
OUT = 1           # MLP output dim (per-node score)
SIM_THRESH = 0.3  # adjacency threshold on cosine similarity
MASK_EVERY = 4    # deterministic masking pattern (every 4th node masked)
DROP_EVERY = 8    # deterministic drop pattern (every 8th node dropped)

assert HID == DIM, "weight stacking below assumes HID == DIM"


# --------------------- fused graph + transformer + MLP kernel ----------------
def fused_gcgl_kernel(node_ids_ref,   # SMEM (B,) int32   (scalar prefetch)
                      x_ref,          # VMEM (N, DIM) f32  concat(m, d), resident
                      wfused_ref,     # VMEM (3, DIM, DIM) [Wqk_scaled, Wvo, W1]
                      vecs_ref,       # VMEM (3, HID)      [b1, w2^T, b2_bcast]
                      out_ref,        # VMEM (1, 1, N+1) per-step output block
                      sim_ref):       # VMEM scratch (N, N) f32, persistent
    b = pl.program_id(0)

    # ---- node-id-invariant prologue (runs only on grid step 0) --------------
    @pl.when(b == 0)
    def _():
        x0 = x_ref[...]
        inv_norm = jax.lax.rsqrt(jnp.sum(x0 * x0, axis=-1, keepdims=True) + 1e-8)
        xn = x0 * inv_norm
        # xn @ xn.T without an XLU transpose (contract dim 1 of both operands)
        sim_ref[...] = jax.lax.dot_general(
            xn, xn, (((1,), (1,)), ((), ())),
            preferred_element_type=jnp.float32)

    nid = node_ids_ref[b]
    x = x_ref[...]

    # ---- deterministic mask / keep patterns from the scalar node_id ---------
    # MASK_EVERY / DROP_EVERY are powers of two -> (v & (k-1)) == v % k.
    row1 = jax.lax.broadcasted_iota(jnp.int32, (N, 1), 0)
    mask_col = (((row1 + nid) & (MASK_EVERY - 1)) == 0)           # (N,1) bool
    rows2 = jax.lax.broadcasted_iota(jnp.int32, (N, N), 0)
    cols2 = jax.lax.broadcasted_iota(jnp.int32, (N, N), 1)
    keep2d = ((((rows2 + nid) & (DROP_EVERY - 1)) != 0) &
              (((cols2 + nid) & (DROP_EVERY - 1)) != 0))          # (N,N) bool

    adj = (sim_ref[...] > SIM_THRESH) & keep2d                    # (N,N) bool
    xm = jnp.where(mask_col, 0.0, x)                              # masked feats

    # ---- masked-graph attention + residual (folded weights) ------------------
    # scores = (xm @ Wqk_scaled) @ xm^T   with Wqk_scaled = wq@wk^T / sqrt(D)
    t = jnp.dot(xm, wfused_ref[0], preferred_element_type=jnp.float32)
    scores = jax.lax.dot_general(t, xm, (((1,), (1,)), ((), ())),
                                 preferred_element_type=jnp.float32)
    scores = jnp.where(adj, scores, -1e30)

    m_row = jnp.max(scores, axis=-1, keepdims=True)
    p = jnp.exp(scores - m_row)
    p = jnp.where(adj, p, 0.0)        # fully-disconnected rows -> zero attention
    denom = jnp.sum(p, axis=-1, keepdims=True) + 1e-9
    p = p * pl.reciprocal(denom, approx=True)

    # h = attn @ wv @ wo  ==  (p @ xm) @ Wvo
    u = jnp.dot(p, xm, preferred_element_type=jnp.float32)
    h = jnp.dot(u, wfused_ref[1], preferred_element_type=jnp.float32)
    out = xm + h                                                   # residual

    # ---- masked-node feature reconstruction loss (MSE over masked rows) -----
    mask_f = mask_col.astype(jnp.float32)
    diff = (out - x) * mask_f
    sq_row = jnp.sum(diff * diff, axis=-1, keepdims=True)          # (N,1)
    num = jnp.sum(sq_row, axis=0, keepdims=True)                   # (1,1)
    cnt = jnp.sum(mask_f, axis=0, keepdims=True) * float(DIM) + 1e-8
    loss11 = num / cnt                                             # (1,1)

    # ---- MLP head, emitted as a lane-oriented (1, N) row ----------------------
    b1_row = vecs_ref[pl.ds(0, 1), :]                              # (1,HID)
    w2_row = vecs_ref[pl.ds(1, 1), :]                              # (1,HID)
    b2_11 = vecs_ref[pl.ds(2, 1), pl.ds(0, 1)]                     # (1,1)
    hmlp = jnp.maximum(
        jnp.dot(out, wfused_ref[2], preferred_element_type=jnp.float32) + b1_row,
        0.0)                                                       # (N,HID)
    score_row = jax.lax.dot_general(w2_row, hmlp, (((1,), (1,)), ((), ())),
                                    preferred_element_type=jnp.float32)  # (1,N)
    score_row = score_row + b2_11

    # lanes [0..N-1] = per-node prediction, lane N = total_loss for this id
    out_ref[...] = jnp.concatenate([score_row, loss11],
                                   axis=1).reshape(1, 1, N + 1)


# ------------------------------ pallas wrapper --------------------------------
def batched_forward(packed, node_ids, m_embed, d_embed):
    """Evaluate modell.forward for a whole batch of node ids in one kernel."""
    wfused, vecs = packed
    x = jnp.concatenate([m_embed, d_embed], axis=0)                # (N, DIM)
    node_ids = node_ids.astype(jnp.int32)
    B = node_ids.shape[0]

    out = pl.pallas_call(
        fused_gcgl_kernel,
        out_shape=jax.ShapeDtypeStruct((B, 1, N + 1), jnp.float32),
        grid_spec=pltpu.PrefetchScalarGridSpec(
            num_scalar_prefetch=1,
            grid=(B,),
            in_specs=[
                # constant block indices -> inputs DMA'd once, resident in VMEM
                pl.BlockSpec((N, DIM), lambda b, ids: (0, 0)),
                pl.BlockSpec((3, DIM, DIM), lambda b, ids: (0, 0, 0)),
                pl.BlockSpec((3, HID), lambda b, ids: (0, 0)),
            ],
            out_specs=pl.BlockSpec((1, 1, N + 1), lambda b, ids: (b, 0, 0)),
            scratch_shapes=[pltpu.VMEM((N, N), jnp.float32)],
        ),
        compiler_params=pltpu.CompilerParams(
            dimension_semantics=("arbitrary",)),
    )(node_ids, x, wfused, vecs)

    prediction = out[:, 0, :N][..., None]      # (B, N, 1)
    total_loss = out[:, 0, N]                  # (B,)
    return prediction, total_loss


def modell_forward(params, node_id, m_embed, d_embed):
    """Single-id API matching the original module signature."""
    # TODO(synk): original submodules (Transformer, GraphConstructionWithMasking,
    # TokenEmbeddingExtractor, MLP) and the DGL graph.edges() call are not
    # provided; this is a synthesized equivalent of their composition.
    packed = pack_params(params)
    node_ids = jnp.asarray(node_id, jnp.int32).reshape(1)
    pred, loss = batched_forward(packed, node_ids, m_embed, d_embed)
    return pred[0], loss[0]


# ------------------------------ parameters -----------------------------------
def init_params(key):
    ks = jax.random.split(key, 6)
    scale = 0.1
    return dict(
        wq=scale * jax.random.normal(ks[0], (DIM, DIM), jnp.float32),
        wk=scale * jax.random.normal(ks[1], (DIM, DIM), jnp.float32),
        wv=scale * jax.random.normal(ks[2], (DIM, DIM), jnp.float32),
        wo=scale * jax.random.normal(ks[3], (DIM, DIM), jnp.float32),
        w1=scale * jax.random.normal(ks[4], (DIM, HID), jnp.float32),
        b1=jnp.zeros((HID,), jnp.float32),
        w2=scale * jax.random.normal(ks[5], (HID, OUT), jnp.float32),
        b2=jnp.zeros((), jnp.float32),
    )


def pack_params(p):
    """Fold + stack weights once (outside the hot path).

    Wqk_scaled = wq @ wk^T / sqrt(D)  ->  scores = (xm @ Wqk) @ xm^T
    Wvo        = wv @ wo              ->  h = (softmax @ xm) @ Wvo
    Mathematically identical forward pass, fewer MXU pushes and fewer DMAs.
    """
    wqk = (p["wq"] @ p["wk"].T) * (1.0 / (DIM ** 0.5))
    wvo = p["wv"] @ p["wo"]
    wfused = jnp.stack([wqk, wvo, p["w1"]], axis=0)                # (3, DIM, DIM)
    vecs = jnp.stack([p["b1"],
                      p["w2"][:, 0],
                      jnp.broadcast_to(p["b2"], (HID,))], axis=0)  # (3, HID)
    return wfused, vecs


# ---------------------------------- main --------------------------------------
if __name__ == "__main__":
    key = jax.random.PRNGKey(0)
    k1, k2, k3 = jax.random.split(key, 3)
    m_embed = jax.random.normal(k1, (N_M, DIM), jnp.float32)
    d_embed = jax.random.normal(k2, (N_D, DIM), jnp.float32)
    params = init_params(k3)
    packed = pack_params(params)

    node_ids = jnp.arange(8, dtype=jnp.int32)       # batch of 8 query node ids
    fwd = jax.jit(batched_forward)
    prediction, total_loss = fwd(packed, node_ids, m_embed, d_embed)
    jax.block_until_ready((prediction, total_loss))

    assert prediction.shape == (8, N, OUT)
    assert total_loss.shape == (8,)
    assert bool(jnp.all(jnp.isfinite(prediction)))
    assert bool(jnp.all(jnp.isfinite(total_loss)))
    print("KERNEL_OK")
</pallas_src>

<mosaic_0001>
module attributes {stable_mosaic.version = 11 : i64} {
  func.func @fused_gcgl_kernel(%arg0: i32, %arg1: memref<8xi32, #tpu.memory_space<smem>>, %arg2: memref<32x32xf32, #tpu.memory_space<vmem>>, %arg3: memref<3x32x32xf32, #tpu.memory_space<vmem>>, %arg4: memref<3x32xf32, #tpu.memory_space<vmem>>, %arg5: memref<1x1x33xf32, #tpu.memory_space<vmem>>, %arg6: memref<32x32xf32, #tpu.memory_space<vmem>>) attributes {dimension_semantics = [#tpu.dimension_semantics<arbitrary>], iteration_bounds = array<i64: 8>, scalar_prefetch = 1 : i64, scratch_operands = 1 : i64, tpu.core_type = #tpu.core_type<tc>, window_params = [{pipeline_mode = #tpu.pipeline_mode<synchronous>, transform_indices = @transform_0, window_bounds = array<i64: 32, 32>}, {pipeline_mode = #tpu.pipeline_mode<synchronous>, transform_indices = @transform_1, window_bounds = array<i64: 3, 32, 32>}, {pipeline_mode = #tpu.pipeline_mode<synchronous>, transform_indices = @transform_2, window_bounds = array<i64: 3, 32>}, {transform_indices = @transform_3, window_bounds = array<i64: 1, 1, 33>}]} {
    %c0_i32 = arith.constant 0 : i32
    %0 = arith.cmpi eq, %arg0, %c0_i32 : i32
    %1 = arith.extui %0 : i1 to i32
    %c0_i32_0 = arith.constant 0 : i32
    %2 = arith.cmpi ne, %1, %c0_i32_0 : i32
    scf.if %2 {
      %c0_42 = arith.constant 0 : index
      %c0_43 = arith.constant 0 : index
      %94 = vector.load %arg2[%c0_42, %c0_43] : memref<32x32xf32, #tpu.memory_space<vmem>>, vector<32x32xf32>
      %95 = arith.mulf %94, %94 : vector<32x32xf32>
      %cst_44 = arith.constant dense<0.000000e+00> : vector<32xf32>
      %96 = vector.multi_reduction <add>, %95, %cst_44 [1] : vector<32x32xf32> to vector<32xf32>
      %97 = vector.shape_cast %96 : vector<32xf32> to vector<32x1xf32>
      %cst_45 = arith.constant 9.99999993E-9 : f32
      %98 = vector.broadcast %cst_45 : f32 to vector<32x1xf32>
      %99 = arith.addf %97, %98 : vector<32x1xf32>
      %100 = math.rsqrt %99 : vector<32x1xf32>
      %101 = vector.broadcast %100 : vector<32x1xf32> to vector<32x32xf32>
      %102 = arith.mulf %94, %101 : vector<32x32xf32>
      %cst_46 = arith.constant dense<0.000000e+00> : vector<32x32xf32>
      %103 = tpu.matmul %102, %102, %cst_46 {dimension_numbers = #tpu.dot_dimension_numbers<[1], [1], [0], [0], [0, 0, 1, 0], [], []>} : vector<32x32xf32>, vector<32x32xf32>, vector<32x32xf32> -> vector<32x32xf32>
      %c0_47 = arith.constant 0 : index
      %c0_48 = arith.constant 0 : index
      %104 = vector.load %arg6[%c0_47, %c0_48] : memref<32x32xf32, #tpu.memory_space<vmem>>, vector<32x32xf32>
      tpu.vector_store %arg6[%c0_47, %c0_48], %103 {strides = array<i32>} : memref<32x32xf32, #tpu.memory_space<vmem>>, vector<32x32xf32>,
    } else {
    }
    %3 = arith.index_cast %arg0 : i32 to index
    %4 = memref.load %arg1[%3] : memref<8xi32, #tpu.memory_space<smem>>
    %c0 = arith.constant 0 : index
    %c0_1 = arith.constant 0 : index
    %5 = vector.load %arg2[%c0, %c0_1] : memref<32x32xf32, #tpu.memory_space<vmem>>, vector<32x32xf32>
    %6 = tpu.iota {dimensions = array<i32: 0>} : vector<32x1xi32>
    %7 = vector.broadcast %4 : i32 to vector<32x1xi32>
    %8 = arith.addi %6, %7 : vector<32x1xi32>
    %c3_i32 = arith.constant 3 : i32
    %9 = vector.broadcast %c3_i32 : i32 to vector<32x1xi32>
    %10 = arith.andi %8, %9 : vector<32x1xi32>
    %c0_i32_2 = arith.constant 0 : i32
    %11 = vector.broadcast %c0_i32_2 : i32 to vector<32x1xi32>
    %12 = arith.cmpi eq, %10, %11 : vector<32x1xi32>
    %13 = tpu.iota {dimensions = array<i32: 0>} : vector<32x32xi32>
    %14 = tpu.iota {dimensions = array<i32: 1>} : vector<32x32xi32>
    %15 = vector.broadcast %4 : i32 to vector<32x32xi32>
    %16 = arith.addi %13, %15 : vector<32x32xi32>
    %c7_i32 = arith.constant 7 : i32
    %17 = vector.broadcast %c7_i32 : i32 to vector<32x32xi32>
    %18 = arith.andi %16, %17 : vector<32x32xi32>
    %c0_i32_3 = arith.constant 0 : i32
    %19 = vector.broadcast %c0_i32_3 : i32 to vector<32x32xi32>
    %20 = arith.cmpi ne, %18, %19 : vector<32x32xi32>
    %21 = vector.broadcast %4 : i32 to vector<32x32xi32>
    %22 = arith.addi %14, %21 : vector<32x32xi32>
    %c7_i32_4 = arith.constant 7 : i32
    %23 = vector.broadcast %c7_i32_4 : i32 to vector<32x32xi32>
    %24 = arith.andi %22, %23 : vector<32x32xi32>
    %c0_i32_5 = arith.constant 0 : i32
    %25 = vector.broadcast %c0_i32_5 : i32 to vector<32x32xi32>
    %26 = arith.cmpi ne, %24, %25 : vector<32x32xi32>
    %27 = arith.andi %20, %26 : vector<32x32xi1>
    %c0_6 = arith.constant 0 : index
    %c0_7 = arith.constant 0 : index
    %28 = vector.load %arg6[%c0_6, %c0_7] : memref<32x32xf32, #tpu.memory_space<vmem>>, vector<32x32xf32>
    %cst = arith.constant 3.000000e-01 : f32
    %29 = vector.broadcast %cst : f32 to vector<32x32xf32>
    %30 = arith.cmpf ogt, %28, %29 : vector<32x32xf32>
    %31 = arith.andi %30, %27 : vector<32x32xi1>
    %cst_8 = arith.constant 0.000000e+00 : f32
    %32 = vector.shape_cast %12 : vector<32x1xi1> to vector<32x1xi1>
    %33 = vector.broadcast %32 : vector<32x1xi1> to vector<32x32xi1>
    %34 = vector.broadcast %cst_8 : f32 to vector<32x32xf32>
    %35 = arith.select %33, %34, %5 : vector<32x32xi1>, vector<32x32xf32>
    %c0_9 = arith.constant 0 : index
    %c0_10 = arith.constant 0 : index
    %c0_11 = arith.constant 0 : index
    %36 = vector.load %arg3[%c0_9, %c0_10, %c0_11] : memref<3x32x32xf32, #tpu.memory_space<vmem>>, vector<1x32x32xf32>
    %37 = vector.shape_cast %36 : vector<1x32x32xf32> to vector<32x32xf32>
    %cst_12 = arith.constant dense<0.000000e+00> : vector<32x32xf32>
    %38 = tpu.matmul %35, %37, %cst_12 {dimension_numbers = #tpu.dot_dimension_numbers<[1], [0], [0], [1], [0, 0, 1, 1], [], []>} : vector<32x32xf32>, vector<32x32xf32>, vector<32x32xf32> -> vector<32x32xf32>
    %cst_13 = arith.constant dense<0.000000e+00> : vector<32x32xf32>
    %39 = tpu.matmul %38, %35, %cst_13 {dimension_numbers = #tpu.dot_dimension_numbers<[1], [1], [0], [0], [0, 0, 1, 0], [], []>} : vector<32x32xf32>, vector<32x32xf32>, vector<32x32xf32> -> vector<32x32xf32>
    %cst_14 = arith.constant -1.000000e+30 : f32
    %40 = vector.broadcast %cst_14 : f32 to vector<32x32xf32>
    %41 = arith.select %31, %39, %40 : vector<32x32xi1>, vector<32x32xf32>
    %cst_15 = arith.constant dense<0xFF800000> : vector<32xf32>
    %42 = vector.multi_reduction <maximumf>, %41, %cst_15 [1] : vector<32x32xf32> to vector<32xf32>
    %43 = vector.shape_cast %42 : vector<32xf32> to vector<32x1xf32>
    %44 = vector.broadcast %43 : vector<32x1xf32> to vector<32x32xf32>
    %45 = arith.subf %41, %44 : vector<32x32xf32>
    %46 = math.exp %45 : vector<32x32xf32>
    %cst_16 = arith.constant 0.000000e+00 : f32
    %47 = vector.broadcast %cst_16 : f32 to vector<32x32xf32>
    %48 = arith.select %31, %46, %47 : vector<32x32xi1>, vector<32x32xf32>
    %cst_17 = arith.constant dense<0.000000e+00> : vector<32xf32>
    %49 = vector.multi_reduction <add>, %48, %cst_17 [1] : vector<32x32xf32> to vector<32xf32>
    %50 = vector.shape_cast %49 : vector<32xf32> to vector<32x1xf32>
    %cst_18 = arith.constant 9.99999971E-10 : f32
    %51 = vector.broadcast %cst_18 : f32 to vector<32x1xf32>
    %52 = arith.addf %50, %51 : vector<32x1xf32>
    %53 = tpu.reciprocal %52 {approx = true} : vector<32x1xf32> -> vector<32x1xf32>
    %54 = vector.broadcast %53 : vector<32x1xf32> to vector<32x32xf32>
    %55 = arith.mulf %48, %54 : vector<32x32xf32>
    %cst_19 = arith.constant dense<0.000000e+00> : vector<32x32xf32>
    %56 = tpu.matmul %55, %35, %cst_19 {dimension_numbers = #tpu.dot_dimension_numbers<[1], [0], [0], [1], [0, 0, 1, 1], [], []>} : vector<32x32xf32>, vector<32x32xf32>, vector<32x32xf32> -> vector<32x32xf32>
    %c1 = arith.constant 1 : index
    %c0_20 = arith.constant 0 : index
    %c0_21 = arith.constant 0 : index
    %57 = vector.load %arg3[%c1, %c0_20, %c0_21] : memref<3x32x32xf32, #tpu.memory_space<vmem>>, vector<1x32x32xf32>
    %58 = vector.shape_cast %57 : vector<1x32x32xf32> to vector<32x32xf32>
    %cst_22 = arith.constant dense<0.000000e+00> : vector<32x32xf32>
    %59 = tpu.matmul %56, %58, %cst_22 {dimension_numbers = #tpu.dot_dimension_numbers<[1], [0], [0], [1], [0, 0, 1, 1], [], []>} : vector<32x32xf32>, vector<32x32xf32>, vector<32x32xf32> -> vector<32x32xf32>
    %60 = arith.addf %35, %59 : vector<32x32xf32>
    %61 = arith.extui %12 : vector<32x1xi1> to vector<32x1xi32>
    %62 = arith.sitofp %61 : vector<32x1xi32> to vector<32x1xf32>
    %63 = arith.subf %60, %5 : vector<32x32xf32>
    %64 = vector.broadcast %62 : vector<32x1xf32> to vector<32x32xf32>
    %65 = arith.mulf %63, %64 : vector<32x32xf32>
    %66 = arith.mulf %65, %65 : vector<32x32xf32>
    %cst_23 = arith.constant dense<0.000000e+00> : vector<32xf32>
    %67 = vector.multi_reduction <add>, %66, %cst_23 [1] : vector<32x32xf32> to vector<32xf32>
    %68 = vector.shape_cast %67 : vector<32xf32> to vector<32x1xf32>
    %cst_24 = arith.constant dense<0.000000e+00> : vector<1xf32>
    %69 = vector.multi_reduction <add>, %68, %cst_24 [0] : vector<32x1xf32> to vector<1xf32>
    %70 = vector.shape_cast %69 : vector<1xf32> to vector<1x1xf32>
    %cst_25 = arith.constant dense<0.000000e+00> : vector<1xf32>
    %71 = vector.multi_reduction <add>, %62, %cst_25 [0] : vector<32x1xf32> to vector<1xf32>
    %72 = vector.shape_cast %71 : vector<1xf32> to vector<1x1xf32>
    %cst_26 = arith.constant 3.200000e+01 : f32
    %73 = vector.broadcast %cst_26 : f32 to vector<1x1xf32>
    %74 = arith.mulf %72, %73 : vector<1x1xf32>
    %cst_27 = arith.constant 9.99999993E-9 : f32
    %75 = vector.broadcast %cst_27 : f32 to vector<1x1xf32>
    %76 = arith.addf %74, %75 : vector<1x1xf32>
    %77 = arith.divf %70, %76 : vector<1x1xf32>
    %c0_28 = arith.constant 0 : index
    %c0_29 = arith.constant 0 : index
    %78 = vector.load %arg4[%c0_28, %c0_29] : memref<3x32xf32, #tpu.memory_space<vmem>>, vector<1x32xf32>
    %c1_30 = arith.constant 1 : index
    %c0_31 = arith.constant 0 : index
    %79 = vector.load %arg4[%c1_30, %c0_31] : memref<3x32xf32, #tpu.memory_space<vmem>>, vector<1x32xf32>
    %c2 = arith.constant 2 : index
    %c0_32 = arith.constant 0 : index
    %80 = vector.load %arg4[%c2, %c0_32] : memref<3x32xf32, #tpu.memory_space<vmem>>, vector<1x1xf32>
    %c2_33 = arith.constant 2 : index
    %c0_34 = arith.constant 0 : index
    %c0_35 = arith.constant 0 : index
    %81 = vector.load %arg3[%c2_33, %c0_34, %c0_35] : memref<3x32x32xf32, #tpu.memory_space<vmem>>, vector<1x32x32xf32>
    %82 = vector.shape_cast %81 : vector<1x32x32xf32> to vector<32x32xf32>
    %cst_36 = arith.constant dense<0.000000e+00> : vector<32x32xf32>
    %83 = tpu.matmul %60, %82, %cst_36 {dimension_numbers = #tpu.dot_dimension_numbers<[1], [0], [0], [1], [0, 0, 1, 1], [], []>} : vector<32x32xf32>, vector<32x32xf32>, vector<32x32xf32> -> vector<32x32xf32>
    %84 = vector.broadcast %78 : vector<1x32xf32> to vector<32x32xf32>
    %85 = arith.addf %83, %84 : vector<32x32xf32>
    %cst_37 = arith.constant 0.000000e+00 : f32
    %86 = vector.broadcast %cst_37 : f32 to vector<32x32xf32>
    %87 = arith.maximumf %85, %86 : vector<32x32xf32>
    %cst_38 = arith.constant dense<0.000000e+00> : vector<1x32xf32>
    %88 = tpu.matmul %79, %87, %cst_38 {dimension_numbers = #tpu.dot_dimension_numbers<[1], [1], [0], [0], [0, 0, 1, 0], [], []>} : vector<1x32xf32>, vector<32x32xf32>, vector<1x32xf32> -> vector<1x32xf32>
    %89 = vector.broadcast %80 : vector<1x1xf32> to vector<1x32xf32>
    %90 = arith.addf %88, %89 : vector<1x32xf32>
    %91 = tpu.concatenate %90, %77 in 1 : vector<1x32xf32>, vector<1x1xf32> -> vector<1x33xf32>
    %92 = vector.shape_cast %91 : vector<1x33xf32> to vector<1x1x33xf32>
    %c0_39 = arith.constant 0 : index
    %c0_40 = arith.constant 0 : index
    %c0_41 = arith.constant 0 : index
    %93 = vector.load %arg5[%c0_39, %c0_40, %c0_41] : memref<1x1x33xf32, #tpu.memory_space<vmem>>, vector<1x1x33xf32>
    tpu.vector_store %arg5[%c0_39, %c0_40, %c0_41], %92 {strides = array<i32>} : memref<1x1x33xf32, #tpu.memory_space<vmem>>, vector<1x1x33xf32>,
    return
  }
  func.func @transform_0(%arg0: i32, %arg1: memref<8xi32, #tpu.memory_space<smem>>) -> (i32, i32) {
    %c0_i32 = arith.constant 0 : i32
    %c0_i32_0 = arith.constant 0 : i32
    %c0_i32_1 = arith.constant 0 : i32
    return %c0_i32, %c0_i32_0 : i32, i32
  }
  func.func @transform_1(%arg0: i32, %arg1: memref<8xi32, #tpu.memory_space<smem>>) -> (i32, i32, i32) {
    %c0_i32 = arith.constant 0 : i32
    %c0_i32_0 = arith.constant 0 : i32
    %c0_i32_1 = arith.constant 0 : i32
    %c0_i32_2 = arith.constant 0 : i32
    return %c0_i32, %c0_i32_0, %c0_i32_1 : i32, i32, i32
  }
  func.func @transform_2(%arg0: i32, %arg1: memref<8xi32, #tpu.memory_space<smem>>) -> (i32, i32) {
    %c0_i32 = arith.constant 0 : i32
    %c0_i32_0 = arith.constant 0 : i32
    %c0_i32_1 = arith.constant 0 : i32
    return %c0_i32, %c0_i32_0 : i32, i32
  }
  func.func @transform_3(%arg0: i32, %arg1: memref<8xi32, #tpu.memory_space<smem>>) -> (i32, i32, i32) {
    %c0_i32 = arith.constant 0 : i32
    %c0_i32_0 = arith.constant 0 : i32
    %c0_i32_1 = arith.constant 0 : i32
    return %arg0, %c0_i32, %c0_i32_0 : i32, i32, i32
  }
}

</mosaic_0001>

<llo_original>
// kernel: batched_forward.1
$region0: #{batched_forward.1}
  #allocation0 [shape = 'u32[]', space=smem, size = 0x4, offset = 0x4, fixed_abs, tag = 'smem constant byte address 0x4 - core index']
  #allocation1 [shape = 'u32[144,128]{1,0:T(1,128)}', space=vmem, size = 0x12000, scoped, tag = 'internal scratch']
  #allocation2 [shape = 'f32[32,32]{1,0:T(8,128)}', space=vmem, size = 0x4000, scoped, tag = 'scratch operand']
  #allocation3 [shape = 's32[1]{0}', space=sflag, size = 0x4, scoped, tag = 'scoped memory for batched_forward.1']
  #allocation4 [shape = 'u8[512]{0}', space=smem, size = 0x200, scoped, tag = 'prefetched SMEM operand 0']
  %s0 = inlined_call_operand.vmem [shape: s32[8], index: 0, kind: input, shape index: {}]
  %s1 = inlined_call_operand.vmem [shape: f32[32,32], index: 1, kind: input, shape index: {}]
  %s2 = inlined_call_operand.hbm [shape: f32[3,32,32], index: 2, kind: input, shape index: {}]
  %s3 = inlined_call_operand.vmem [shape: f32[3,32], index: 3, kind: input, shape index: {}]
  %s4 = inlined_call_operand.vmem [shape: f32[8,1,33], index: 4, kind: output, shape index: {}]
  %s5 = sld [smem:[#allocation0]]
  $region53: #{batched_forward.1} parent=0
    _
  %s7 = ssub.s32 1, %s5
  %s8 = scalar_select 0, %s7, %s5
  %s9 = sshll.u32 %s0, 4
  %s10 = int_to_ptr.vmem [resolvable:$true] %s9
  %12 = dma.vmem_to_smem %s10, 16, [#allocation4], [#allocation3]
  %13 = dma.done [#allocation3], 16
  %14 = sfence
  $region1: #{batched_forward.1} parent=0
    #allocation5 [shape = 'u8[49152]{0}', space=vmem, size = 0xc000, scoped, tag = 'input window, operand 2, single buffered']
    #allocation6 [shape = 's32[2]{0}', space=sflag, size = 0x8, scoped, tag = 'scoped memory for batched_forward.1']
    %15 = vsyncpa [#allocation6], 0
    loop: start=0, step=1, limit=10
    $region2: #{batched_forward.1} parent=1 // loop_pre_header
      _
    $region3: #{batched_forward.1} parent=1 // loop_header
      %s17 = sphi 0, %s21
      %p18 = scmp.ge.s32.totalorder %s17, 10
      %s25 = sphi 0, %s25
      %s27 = sphi 0, %s25
      %s28 = sphi 0, %s27
      %s42 = sphi 0, %s28
      %s46 = sphi 0, %s46
      %s48 = sphi 0, %s46
      %s49 = sphi 0, %s48
      %s63 = sphi 0, %s49
      %s67 = sphi 0, %s67
      %s69 = sphi 0, %s67
      %s70 = sphi 0, %s69
      %s84 = sphi 0, %s70
      %s90 = sphi 0, %s92
      %s93 = sphi 0, %s90
      %s94 = sphi 0, %s93
      %s110 = sphi 0, %s94
    $region4: #{batched_forward.1} parent=1 // loop_header_branch
      %20 = sbr.rel (%p18) target = $region8
    $region5: #{batched_forward.1} parent=1 // loop_body
      %s22 = ssub.s32 %s17, 1
      %s23 = ssub.s32 %s17, 2
      %s24 = sadd.s32 %s17, 1
      %s26 = sadd.s32 %s25, 1
      %p29 = scmp.eq.s32.totalorder %s17, 7
      %p30 = scmp.ne.s32.totalorder %s25, %s27
      %p31 = scmp.eq.s32.totalorder %s17, 0
      %p32 = por %p30, %p31
      %p33 = scmp.ne.s32.totalorder %s25, %s27
      %p34 = scmp.eq.s32.totalorder %s22, 7
      %p35 = por %p33, %p34
      %p36 = scmp.ne.s32.totalorder %s27, %s28
      %p37 = scmp.eq.s32.totalorder %s22, 0
      %p38 = por %p36, %p37
      %p39 = scmp.ne.s32.totalorder %s27, %s28
      %p40 = scmp.eq.s32.totalorder %s23, 7
      %p41 = por %p39, %p40
      %p43 = scmp.ne.s32.totalorder %s28, %s42
      %p44 = scmp.eq.s32.totalorder %s23, 0
      %p45 = por %p43, %p44
      %s47 = sadd.s32 %s46, 1
      %p50 = scmp.eq.s32.totalorder %s17, 7
      %p51 = scmp.ne.s32.totalorder %s46, %s48
      %p52 = scmp.eq.s32.totalorder %s17, 0
      %p53 = por %p51, %p52
      %p54 = scmp.ne.s32.totalorder %s46, %s48
      %p55 = scmp.eq.s32.totalorder %s22, 7
      %p56 = por %p54, %p55
      %p57 = scmp.ne.s32.totalorder %s48, %s49
      %p58 = scmp.eq.s32.totalorder %s22, 0
      %p59 = por %p57, %p58
      %p60 = scmp.ne.s32.totalorder %s48, %s49
      %p61 = scmp.eq.s32.totalorder %s23, 7
      %p62 = por %p60, %p61
      %p64 = scmp.ne.s32.totalorder %s49, %s63
      %p65 = scmp.eq.s32.totalorder %s23, 0
      %p66 = por %p64, %p65
      %s68 = sadd.s32 %s67, 1
      %p71 = scmp.eq.s32.totalorder %s17, 7
      %p72 = scmp.ne.s32.totalorder %s67, %s69
      %p73 = scmp.eq.s32.totalorder %s17, 0
      %p74 = por %p72, %p73
      %p75 = scmp.ne.s32.totalorder %s67, %s69
      %p76 = scmp.eq.s32.totalorder %s22, 7
      %p77 = por %p75, %p76
      %p78 = scmp.ne.s32.totalorder %s69, %s70
      %p79 = scmp.eq.s32.totalorder %s22, 0
      %p80 = por %p78, %p79
      %p81 = scmp.ne.s32.totalorder %s69, %s70
      %p82 = scmp.eq.s32.totalorder %s23, 7
      %p83 = por %p81, %p82
      %p85 = scmp.ne.s32.totalorder %s70, %s84
      %p86 = scmp.eq.s32.totalorder %s23, 0
      %p87 = por %p85, %p86
      %s88 = ssub.s32 %s17, %s24
      %p89 = scmp.eq.s32.totalorder %s88, 0
      %s91 = sadd.s32 %s90, 1
      %s92 = scalar_select %p89, %s90, %s91
      %p95 = pneg %p89
      %p96 = scmp.eq.s32.totalorder %s17, 7
      %p97 = por %p95, %p96
      %p98 = scmp.ne.s32.totalorder %s90, %s93
      %p99 = scmp.eq.s32.totalorder %s17, 0
      %p100 = por %p98, %p99
      %p101 = scmp.ne.s32.totalorder %s90, %s93
      %p102 = scmp.eq.s32.totalorder %s22, 7
      %p103 = por %p101, %p102
      %p104 = scmp.ne.s32.totalorder %s93, %s94
      %p105 = scmp.eq.s32.totalorder %s22, 0
      %p106 = por %p104, %p105
      %p107 = scmp.ne.s32.totalorder %s93, %s94
      %p108 = scmp.eq.s32.totalorder %s23, 7
      %p109 = por %p107, %p108
      %p111 = scmp.ne.s32.totalorder %s94, %s110
      %p112 = scmp.eq.s32.totalorder %s23, 0
      %p113 = por %p111, %p112
      %p114 = scmp.le.s32.totalorder 1, %s17
      %p115 = scmp.lt.s32.totalorder %s17, 9
      %p116 = pnand %p114, %p115
      %p117 = pneg %p116
      // Predicated region
      $region9: #{batched_forward.1} parent=5 // pred_check
        _
      $region10: #{batched_forward.1} parent=5 // pred_check_branch
        %119 = sbr.rel (%p116) target = $region12
      $region11: #{batched_forward.1} parent=5 // pred_region
        %s120 = ssub.s32 %s17, 1
        // Predicated region
        $region13: #{batched_forward.1} parent=11 // pred_check
          %p121 = pneg %p38
        $region14: #{batched_forward.1} parent=11 // pred_check_branch
          %123 = sbr.rel (%p121) target = $region16
        $region15: #{batched_forward.1} parent=11 // pred_region
          _
        $region16: #{batched_forward.1} parent=11 // pred_fallthru
          _
        // Predicated region
        $region17: #{batched_forward.1} parent=11 // pred_check
          %p124 = pneg %p59
        $region18: #{batched_forward.1} parent=11 // pred_check_branch
          %126 = sbr.rel (%p124) target = $region20
        $region19: #{batched_forward.1} parent=11 // pred_region
          %s128 = ssub.s32 1536, 1536
          %129 = vsyncadd [#allocation6], %s128
          %s130 = sshll.u32 [#allocation5], 4
          %s131 = int_to_ptr.vmem [resolvable:$true] %s130
          %136 = dma.hbm_to_vmem [thread:$0]  %s2, 1536, %s131, [#allocation6], 128, 128, 8
        $region20: #{batched_forward.1} parent=11 // pred_fallthru
          _
        // Predicated region
        $region21: #{batched_forward.1} parent=11 // pred_check
          %p137 = pneg %p80
        $region22: #{batched_forward.1} parent=11 // pred_check_branch
          %139 = sbr.rel (%p137) target = $region24
        $region23: #{batched_forward.1} parent=11 // pred_region
          _
        $region24: #{batched_forward.1} parent=11 // pred_fallthru
          _
      $region12: #{batched_forward.1} parent=5 // pred_fallthru
        _
      %p140 = scmp.lt.s32.totalorder %s17, 8
      // Predicated region
      $region25: #{batched_forward.1} parent=5 // pred_check
        %p141 = pneg %p140
      $region26: #{batched_forward.1} parent=5 // pred_check_branch
        %143 = sbr.rel (%p141) target = $region28
      $region27: #{batched_forward.1} parent=5 // pred_region
        _
      $region28: #{batched_forward.1} parent=5 // pred_fallthru
        _
      %p144 = scmp.le.s32.totalorder 1, %s17
      %p145 = scmp.lt.s32.totalorder %s17, 9
      %p146 = pnand %p144, %p145
      %p147 = pneg %p146
      // Predicated region
      $region29: #{batched_forward.1} parent=5 // pred_check
        _
      $region30: #{batched_forward.1} parent=5 // pred_check_branch
        %149 = sbr.rel (%p146) target = $region32
      $region31: #{batched_forward.1} parent=5 // pred_region
        %s150 = ssub.s32 %s17, 1
        // Predicated region
        $region33: #{batched_forward.1} parent=31 // pred_check
          %p151 = pneg %p59
        $region34: #{batched_forward.1} parent=31 // pred_check_branch
          %153 = sbr.rel (%p151) target = $region36
        $region35: #{batched_forward.1} parent=31 // pred_region
          %154 = dma.done [#allocation6], 1536
        $region36: #{batched_forward.1} parent=31 // pred_fallthru
          _
        %p155 = pneg %p38
        %p156 = pneg %p35
        %p157 = pneg %p59
        %p158 = pneg %p56
        %p159 = pneg %p80
        %p160 = pneg %p77
        %p161 = pneg %p106
        %p162 = pneg %p103
        %p163 = scmp.lt.s32.totalorder %s22, 7
        %s164 = scalar_select %p163, %s22, 7
        %s165 = scalar_lea.vmem %s4, %s164
        %p166 = scmp.lt.s32.totalorder %s22, 7
        %s167 = scalar_select %p166, %s22, 7
        %s168 = scalar_lea.vmem %s4, %s167
        %p169 = scmp.eq.s32.totalorder %s22, 0
        // Predicated region
        $region37: #{batched_forward.1} parent=31 // pred_check
          %p170 = pneg %p169
        $region38: #{batched_forward.1} parent=31 // pred_check_branch
          %172 = sbr.rel (%p170) target = $region40
        $region39: #{batched_forward.1} parent=31 // pred_region
          %v173 = vld [vmem:[%s1] sm:$0xff]
          %v174 = vld [vmem:[%s1 + $0x8] sm:$0xff]
          %v175 = vld [vmem:[%s1 + $0x10] sm:$0xff]
          %v176 = vld [vmem:[%s1 + $0x18] sm:$0xff]
          %v177 = vmul.f32 %v173, %v173
          %v178 = vmul.f32 %v174, %v174
          %v179 = vmul.f32 %v175, %v175
          %v180 = vmul.f32 %v176, %v176
          %vm181 = vcmask 261120
          %v182 = vsel %vm181, %v177, 0.0
          %183 = vadd.xlane.f32.xlu0 %v182
          %v184 = vpop.xlane.xlu0 %183
          %v185 = vsel %vm181, %v178, 0.0
          %186 = vadd.xlane.f32.xlu0 %v185
          %v187 = vpop.xlane.xlu0 %186
          %v188 = vsel %vm181, %v179, 0.0
          %189 = vadd.xlane.f32.xlu0 %v188
          %v190 = vpop.xlane.xlu0 %189
          %v191 = vsel %vm181, %v180, 0.0
          %192 = vadd.xlane.f32.xlu0 %v191
          %v193 = vpop.xlane.xlu0 %192
          %v194 = vadd.f32 %v184, 1e-08
          %v195 = vadd.f32 %v187, 1e-08
          %v196 = vadd.f32 %v190, 1e-08
          %v197 = vadd.f32 %v193, 1e-08
          %v198 = vrsqrt.pop %v194
          %v199 = vrsqrt.pop %v195
          %v200 = vrsqrt.pop %v196
          %v201 = vrsqrt.pop %v197
          %v202 = vmul.f32 %v173, %v198
          %v203 = vmul.f32 %v174, %v199
          %v204 = vmul.f32 %v175, %v200
          %v205 = vmul.f32 %v176, %v201
          %v207 = vsel %vm181, %v202, 0
          %v210 = vsel %vm181, %v203, 0
          %v213 = vsel %vm181, %v204, 0
          %v216 = vsel %vm181, %v205, 0
          %218 = vmatprep.subr.mxu0 0.0
          %219 = vmatpush1.xpose.msra.mxu0 %v207
          %220 = vmatprep.subr.mxu0 0.0
          %221 = vmatpush1.xpose.msra.mxu0 %v210
          %222 = vmatprep.subr.mxu0 0.0
          %223 = vmatpush1.xpose.msra.mxu0 %v213
          %224 = vmatprep.subr.mxu0 0.0
          %225 = vmatpush1.xpose.msra.mxu0 %v216
          %226 = vmatprep.subr.mxu0 0.0
          %227 = vmatpush1.xpose.msra.mxu0 0.0
          %228 = vmatprep.subr.mxu0 0.0
          %229 = vmatpush1.xpose.msra.mxu0 0.0
          %230 = vmatprep.subr.mxu0 0.0
          %231 = vmatpush1.xpose.msra.mxu0 0.0
          %232 = vmatprep.subr.mxu0 0.0
          %233 = vmatpush1.xpose.msra.mxu0 0.0
          %234 = vmatprep.subr.mxu0 0.0
          %235 = vmatpush1.xpose.msra.mxu0 0.0
          %236 = vmatprep.subr.mxu0 0.0
          %237 = vmatpush1.xpose.msra.mxu0 0.0
          %238 = vmatprep.subr.mxu0 0.0
          %239 = vmatpush1.xpose.msra.mxu0 0.0
          %240 = vmatprep.subr.mxu0 0.0
          %241 = vmatpush1.xpose.msra.mxu0 0.0
          %242 = vmatprep.subr.mxu0 0.0
          %243 = vmatpush1.xpose.msra.mxu0 0.0
          %244 = vmatprep.subr.mxu0 0.0
          %245 = vmatpush1.xpose.msra.mxu0 0.0
          %246 = vmatprep.subr.mxu0 0.0
          %247 = vmatpush1.xpose.msra.mxu0 0.0
          %248 = vmatprep.subr.mxu0 0.0
          %249 = vmatpush1.xpose.msra.mxu0 0.0
          %250 = vmatprep.subr.mxu0 0.0
          %251 = vmatpush1.xpose.msra.mxu0 0.0
          %252 = vmatprep.subr.mxu0 0.0
          %253 = vmatpush1.xpose.msra.mxu0 0.0
          %254 = vmatprep.subr.mxu0 0.0
          %255 = vmatpush1.xpose.msra.mxu0 0.0
          %256 = vmatprep.subr.mxu0 0.0
          %257 = vmatpush1.xpose.msra.mxu0 0.0
          %258 = vmatprep.subr.mxu0 0.0
          %259 = vmatpush1.xpose.msra.mxu0 0.0
          %260 = vmatprep.subr.mxu0 0.0
          %261 = vmatpush1.xpose.msra.mxu0 0.0
          %262 = vmatprep.subr.mxu0 0.0
          %263 = vmatpush1.xpose.msra.mxu0 0.0
          %264 = vmatprep.subr.mxu0 0.0
          %265 = vmatpush1.xpose.msra.mxu0 0.0
          %266 = vmatprep.subr.mxu0 0.0
          %267 = vmatpush1.xpose.msra.mxu0 0.0
          %268 = vmatprep.subr.mxu0 0.0
          %269 = vmatpush1.xpose.msra.mxu0 0.0
          %270 = vmatprep.subr.mxu0 0.0
          %271 = vmatpush1.xpose.msra.mxu0 0.0
          %272 = vmatprep.subr.mxu0 0.0
          %273 = vmatpush1.xpose.msra.mxu0 0.0
          %274 = vmatprep.subr.mxu0 0.0
          %275 = vmatpush1.xpose.msra.mxu0 0.0
          %276 = vmatprep.subr.mxu0 0.0
          %277 = vmatpush1.xpose.msra.mxu0 0.0
          %278 = vmatprep.subr.mxu0 0.0
          %279 = vmatpush1.xpose.msra.mxu0 0.0
          %280 = vmatprep.subr.mxu0 0.0
          %281 = vmatpush1.xpose.msra.mxu0 0.0
          %282 = vmatprep.mubr.f32.mxu0 0.0
          %283 = vmatmul.mubr.f32.gmra.mrb[0].mxu0 %v207
          %v284 = vpop.f32.mrb[0].mxu0
          %v285 = vadd.f32 0.0, %v284
          %v286 = vpop.f32.mrb[0].mxu0
          %287 = vmatprep.mubr.f32.mxu0 0.0
          %288 = vmatmul.mubr.f32.gmra.mrb[0].mxu0 %v210
          %v289 = vpop.f32.mrb[0].mxu0
          %v290 = vadd.f32 0.0, %v289
          %v291 = vpop.f32.mrb[0].mxu0
          %292 = vmatprep.mubr.f32.mxu0 0.0
          %293 = vmatmul.mubr.f32.gmra.mrb[0].mxu0 %v213
          %v294 = vpop.f32.mrb[0].mxu0
          %v295 = vadd.f32 0.0, %v294
          %v296 = vpop.f32.mrb[0].mxu0
          %297 = vmatprep.mubr.f32.mxu0 0.0
          %298 = vmatmul.mubr.f32.gmra.mrb[0].mxu0 %v216
          %v299 = vpop.f32.mrb[0].mxu0
          %v300 = vadd.f32 0.0, %v299
          %v301 = vpop.f32.mrb[0].mxu0
          %302 = vdwg.mxu0
          %303 = vst.msk [vmem:[#allocation2] sm:$0xff] %vm181, %v285
          %304 = vst.msk [vmem:[#allocation2 + $0x8] sm:$0xff] %vm181, %v290
          %305 = vst.msk [vmem:[#allocation2 + $0x10] sm:$0xff] %vm181, %v295
          %306 = vst.msk [vmem:[#allocation2 + $0x18] sm:$0xff] %vm181, %v300
        $region40: #{batched_forward.1} parent=31 // pred_fallthru
          _
        %s307 = sld [smem:[#allocation4 + %s22]]
        %v308 = vld [vmem:[%s1] sm:$0xff]
        %v309 = vld [vmem:[%s1 + $0x8] sm:$0xff]
        %v310 = vld [vmem:[%s1 + $0x10] sm:$0xff]
        %v311 = vld [vmem:[%s1 + $0x18] sm:$0xff]
        %v312 = vlaneseq
        %v313 = vshrl.u32 %v312, 7
        %v314 = vadd.s32 %v313, 8
        %v315 = vadd.s32 %v313, 16
        %v316 = vadd.s32 %v313, 24
        %v317 = vstv %s307
        %v318 = vadd.s32 %v313, %v317
        %v319 = vadd.s32 %v314, %v317
        %v320 = vadd.s32 %v315, %v317
        %v321 = vadd.s32 %v316, %v317
        %v322 = vand.u32 %v318, 3
        %v323 = vand.u32 %v319, 3
        %v324 = vand.u32 %v320, 3
        %v325 = vand.u32 %v321, 3
        %vm326 = vcmp.eq.s32.totalorder %v322, 0
        %vm327 = vcmp.eq.s32.totalorder %v323, 0
        %vm328 = vcmp.eq.s32.totalorder %v324, 0
        %vm329 = vcmp.eq.s32.totalorder %v325, 0
        %v330 = vlaneseq
        %v331 = vand.u32 %v330, 127
        %v332 = vand.u32 %v318, 7
        %v333 = vand.u32 %v319, 7
        %v334 = vand.u32 %v320, 7
        %v335 = vand.u32 %v321, 7
        %vm336 = vcmp.ne.s32.totalorder %v332, 0
        %vm337 = vcmp.ne.s32.totalorder %v333, 0
        %vm338 = vcmp.ne.s32.totalorder %v334, 0
        %vm339 = vcmp.ne.s32.totalorder %v335, 0
        %v340 = vadd.s32 %v331, %v317
        %v341 = vand.u32 %v340, 7
        %vm342 = vcmp.ne.s32.totalorder %v341, 0
        %vm343 = vmand %vm336, %vm342
        %vm344 = vmand %vm337, %vm342
        %vm345 = vmand %vm338, %vm342
        %vm346 = vmand %vm339, %vm342
        %v347 = vld [vmem:[#allocation2] sm:$0xff]
        %v348 = vld [vmem:[#allocation2 + $0x8] sm:$0xff]
        %v349 = vld [vmem:[#allocation2 + $0x10] sm:$0xff]
        %v350 = vld [vmem:[#allocation2 + $0x18] sm:$0xff]
        %vm351 = vcmp.gt.f32.partialorder %v347, 0.3
        %vm352 = vcmp.gt.f32.partialorder %v348, 0.3
        %vm353 = vcmp.gt.f32.partialorder %v349, 0.3
        %vm354 = vcmp.gt.f32.partialorder %v350, 0.3
        %vm355 = vmand %vm351, %vm343
        %vm356 = vmand %vm352, %vm344
        %vm357 = vmand %vm353, %vm345
        %vm358 = vmand %vm354, %vm346
        %v359 = vsel %vm326, 1, 0
        %v360 = vsel %vm327, 1, 0
        %v361 = vsel %vm328, 1, 0
        %v362 = vsel %vm329, 1, 0
        %vm363 = vcmp.eq.s32.totalorder %v359, 1
        %vm364 = vcmp.eq.s32.totalorder %v360, 1
        %vm365 = vcmp.eq.s32.totalorder %v361, 1
        %vm366 = vcmp.eq.s32.totalorder %v362, 1
        %v367 = vsel %vm363, 0.0, %v308
        %v368 = vsel %vm364, 0.0, %v309
        %v369 = vsel %vm365, 0.0, %v310
        %v370 = vsel %vm366, 0.0, %v311
        %v371 = vld [vmem:[#allocation5] sm:$0xff]
        %v372 = vld [vmem:[#allocation5 + $0x8] sm:$0xff]
        %v373 = vld [vmem:[#allocation5 + $0x10] sm:$0xff]
        %v374 = vld [vmem:[#allocation5 + $0x18] sm:$0xff]
        %vm375 = vcmask 261120
        %v377 = vsel %vm375, %v367, 0
        %v380 = vsel %vm375, %v368, 0
        %v383 = vsel %vm375, %v369, 0
        %v386 = vsel %vm375, %v370, 0
        %388 = vmatprep.subr.mxu0 0.0
        %389 = vmatpush1.msra.mxu0 %v371
        %390 = vmatprep.subr.mxu0 0.0
        %391 = vmatpush1.msra.mxu0 %v372
        %392 = vmatprep.subr.mxu0 0.0
        %393 = vmatpush1.msra.mxu0 %v373
        %394 = vmatprep.subr.mxu0 0.0
        %395 = vmatpush1.msra.mxu0 %v374
        %396 = vmatprep.subr.mxu0 0.0
        %397 = vmatpush1.msra.mxu0 0.0
        %398 = vmatprep.subr.mxu0 0.0
        %399 = vmatpush1.msra.mxu0 0.0
        %400 = vmatprep.subr.mxu0 0.0
        %401 = vmatpush1.msra.mxu0 0.0
        %402 = vmatprep.subr.mxu0 0.0
        %403 = vmatpush1.msra.mxu0 0.0
        %404 = vmatprep.subr.mxu0 0.0
        %405 = vmatpush1.msra.mxu0 0.0
        %406 = vmatprep.subr.mxu0 0.0
        %407 = vmatpush1.msra.mxu0 0.0
        %408 = vmatprep.subr.mxu0 0.0
        %409 = vmatpush1.msra.mxu0 0.0
        %410 = vmatprep.subr.mxu0 0.0
        %411 = vmatpush1.msra.mxu0 0.0
        %412 = vmatprep.subr.mxu0 0.0
        %413 = vmatpush1.msra.mxu0 0.0
        %414 = vmatprep.subr.mxu0 0.0
        %415 = vmatpush1.msra.mxu0 0.0
        %416 = vmatprep.subr.mxu0 0.0
        %417 = vmatpush1.msra.mxu0 0.0
        %418 = vmatprep.subr.mxu0 0.0
        %419 = vmatpush1.msra.mxu0 0.0
        %420 = vmatprep.subr.mxu0 0.0
        %421 = vmatpush1.msra.mxu0 0.0
        %422 = vmatprep.subr.mxu0 0.0
        %423 = vmatpush1.msra.mxu0 0.0
        %424 = vmatprep.subr.mxu0 0.0
        %425 = vmatpush1.msra.mxu0 0.0
        %426 = vmatprep.subr.mxu0 0.0
        %427 = vmatpush1.msra.mxu0 0.0
        %428 = vmatprep.subr.mxu0 0.0
        %429 = vmatpush1.msra.mxu0 0.0
        %430 = vmatprep.subr.mxu0 0.0
        %431 = vmatpush1.msra.mxu0 0.0
        %432 = vmatprep.subr.mxu0 0.0
        %433 = vmatpush1.msra.mxu0 0.0
        %434 = vmatprep.subr.mxu0 0.0
        %435 = vmatpush1.msra.mxu0 0.0
        %436 = vmatprep.subr.mxu0 0.0
        %437 = vmatpush1.msra.mxu0 0.0
        %438 = vmatprep.subr.mxu0 0.0
        %439 = vmatpush1.msra.mxu0 0.0
        %440 = vmatprep.subr.mxu0 0.0
        %441 = vmatpush1.msra.mxu0 0.0
        %442 = vmatprep.subr.mxu0 0.0
        %443 = vmatpush1.msra.mxu0 0.0
        %444 = vmatprep.subr.mxu0 0.0
        %445 = vmatpush1.msra.mxu0 0.0
        %446 = vmatprep.subr.mxu0 0.0
        %447 = vmatpush1.msra.mxu0 0.0
        %448 = vmatprep.subr.mxu0 0.0
        %449 = vmatpush1.msra.mxu0 0.0
        %450 = vmatprep.subr.mxu0 0.0
        %451 = vmatpush1.msra.mxu0 0.0
        %452 = vmatprep.mubr.f32.mxu0 0.0
        %453 = vmatmul.mubr.f32.gmra.mrb[0].mxu0 %v377
        %v454 = vpop.f32.mrb[0].mxu0
        %v455 = vadd.f32 0.0, %v454
        %v456 = vpop.f32.mrb[0].mxu0
        %457 = vmatprep.mubr.f32.mxu0 0.0
        %458 = vmatmul.mubr.f32.gmra.mrb[0].mxu0 %v380
        %v459 = vpop.f32.mrb[0].mxu0
        %v460 = vadd.f32 0.0, %v459
        %v461 = vpop.f32.mrb[0].mxu0
        %462 = vmatprep.mubr.f32.mxu0 0.0
        %463 = vmatmul.mubr.f32.gmra.mrb[0].mxu0 %v383
        %v464 = vpop.f32.mrb[0].mxu0
        %v465 = vadd.f32 0.0, %v464
        %v466 = vpop.f32.mrb[0].mxu0
        %467 = vmatprep.mubr.f32.mxu0 0.0
        %468 = vmatmul.mubr.f32.gmra.mrb[0].mxu0 %v386
        %v469 = vpop.f32.mrb[0].mxu0
        %v470 = vadd.f32 0.0, %v469
        %v471 = vpop.f32.mrb[0].mxu0
        %472 = vdwg.mxu0
        %v474 = vsel %vm375, %v455, 0
        %v477 = vsel %vm375, %v460, 0
        %v480 = vsel %vm375, %v465, 0
        %v483 = vsel %vm375, %v470, 0
        %485 = vmatprep.subr.mxu0 0.0
        %486 = vmatpush1.xpose.msra.mxu0 %v377
        %487 = vmatprep.subr.mxu0 0.0
        %488 = vmatpush1.xpose.msra.mxu0 %v380
        %489 = vmatprep.subr.mxu0 0.0
        %490 = vmatpush1.xpose.msra.mxu0 %v383
        %491 = vmatprep.subr.mxu0 0.0
        %492 = vmatpush1.xpose.msra.mxu0 %v386
        %493 = vmatprep.subr.mxu0 0.0
        %494 = vmatpush1.xpose.msra.mxu0 0.0
        %495 = vmatprep.subr.mxu0 0.0
        %496 = vmatpush1.xpose.msra.mxu0 0.0
        %497 = vmatprep.subr.mxu0 0.0
        %498 = vmatpush1.xpose.msra.mxu0 0.0
        %499 = vmatprep.subr.mxu0 0.0
        %500 = vmatpush1.xpose.msra.mxu0 0.0
        %501 = vmatprep.subr.mxu0 0.0
        %502 = vmatpush1.xpose.msra.mxu0 0.0
        %503 = vmatprep.subr.mxu0 0.0
        %504 = vmatpush1.xpose.msra.mxu0 0.0
        %505 = vmatprep.subr.mxu0 0.0
        %506 = vmatpush1.xpose.msra.mxu0 0.0
        %507 = vmatprep.subr.mxu0 0.0
        %508 = vmatpush1.xpose.msra.mxu0 0.0
        %509 = vmatprep.subr.mxu0 0.0
        %510 = vmatpush1.xpose.msra.mxu0 0.0
        %511 = vmatprep.subr.mxu0 0.0
        %512 = vmatpush1.xpose.msra.mxu0 0.0
        %513 = vmatprep.subr.mxu0 0.0
        %514 = vmatpush1.xpose.msra.mxu0 0.0
        %515 = vmatprep.subr.mxu0 0.0
        %516 = vmatpush1.xpose.msra.mxu0 0.0
        %517 = vmatprep.subr.mxu0 0.0
        %518 = vmatpush1.xpose.msra.mxu0 0.0
        %519 = vmatprep.subr.mxu0 0.0
        %520 = vmatpush1.xpose.msra.mxu0 0.0
        %521 = vmatprep.subr.mxu0 0.0
        %522 = vmatpush1.xpose.msra.mxu0 0.0
        %523 = vmatprep.subr.mxu0 0.0
        %524 = vmatpush1.xpose.msra.mxu0 0.0
        %525 = vmatprep.subr.mxu0 0.0
        %526 = vmatpush1.xpose.msra.mxu0 0.0
        %527 = vmatprep.subr.mxu0 0.0
        %528 = vmatpush1.xpose.msra.mxu0 0.0
        %529 = vmatprep.subr.mxu0 0.0
        %530 = vmatpush1.xpose.msra.mxu0 0.0
        %531 = vmatprep.subr.mxu0 0.0
        %532 = vmatpush1.xpose.msra.mxu0 0.0
        %533 = vmatprep.subr.mxu0 0.0
        %534 = vmatpush1.xpose.msra.mxu0 0.0
        %535 = vmatprep.subr.mxu0 0.0
        %536 = vmatpush1.xpose.msra.mxu0 0.0
        %537 = vmatprep.subr.mxu0 0.0
        %538 = vmatpush1.xpose.msra.mxu0 0.0
        %539 = vmatprep.subr.mxu0 0.0
        %540 = vmatpush1.xpose.msra.mxu0 0.0
        %541 = vmatprep.subr.mxu0 0.0
        %542 = vmatpush1.xpose.msra.mxu0 0.0
        %543 = vmatprep.subr.mxu0 0.0
        %544 = vmatpush1.xpose.msra.mxu0 0.0
        %545 = vmatprep.subr.mxu0 0.0
        %546 = vmatpush1.xpose.msra.mxu0 0.0
        %547 = vmatprep.subr.mxu0 0.0
        %548 = vmatpush1.xpose.msra.mxu0 0.0
        %549 = vmatprep.mubr.f32.mxu0 0.0
        %550 = vmatmul.mubr.f32.gmra.mrb[0].mxu0 %v474
        %v551 = vpop.f32.mrb[0].mxu0
        %v552 = vadd.f32 0.0, %v551
        %v553 = vpop.f32.mrb[0].mxu0
        %554 = vmatprep.mubr.f32.mxu0 0.0
        %555 = vmatmul.mubr.f32.gmra.mrb[0].mxu0 %v477
        %v556 = vpop.f32.mrb[0].mxu0
        %v557 = vadd.f32 0.0, %v556
        %v558 = vpop.f32.mrb[0].mxu0
        %559 = vmatprep.mubr.f32.mxu0 0.0
        %560 = vmatmul.mubr.f32.gmra.mrb[0].mxu0 %v480
        %v561 = vpop.f32.mrb[0].mxu0
        %v562 = vadd.f32 0.0, %v561
        %v563 = vpop.f32.mrb[0].mxu0
        %564 = vmatprep.mubr.f32.mxu0 0.0
        %565 = vmatmul.mubr.f32.gmra.mrb[0].mxu0 %v483
        %v566 = vpop.f32.mrb[0].mxu0
        %v567 = vadd.f32 0.0, %v566
        %v568 = vpop.f32.mrb[0].mxu0
        %569 = vdwg.mxu0
        %v570 = vsel %vm355, %v552, -1e+30
        %v571 = vsel %vm356, %v557, -1e+30
        %v572 = vsel %vm357, %v562, -1e+30
        %v573 = vsel %vm358, %v567, -1e+30
        %v574 = vsel %vm375, %v570, -inf
        %575 = vmax.xlane.f32.xlu0 %v574
        %v576 = vpop.xlane.xlu0 %575
        %v577 = vsel %vm375, %v571, -inf
        %578 = vmax.xlane.f32.xlu0 %v577
        %v579 = vpop.xlane.xlu0 %578
        %v580 = vsel %vm375, %v572, -inf
        %581 = vmax.xlane.f32.xlu0 %v580
        %v582 = vpop.xlane.xlu0 %581
        %v583 = vsel %vm375, %v573, -inf
        %584 = vmax.xlane.f32.xlu0 %v583
        %v585 = vpop.xlane.xlu0 %584
        %v586 = vsub.f32 %v570, %v576
        %v587 = vsub.f32 %v571, %v579
        %v588 = vsub.f32 %v572, %v582
        %v589 = vsub.f32 %v573, %v585
        %v590 = vmul.f32 %v586, 1.442695
        %v591 = vpow.pop %v590
        %v592 = vmul.f32 %v587, 1.442695
        %v593 = vpow.pop %v592
        %v594 = vmul.f32 %v588, 1.442695
        %v595 = vpow.pop %v594
        %v596 = vmul.f32 %v589, 1.442695
        %v597 = vpow.pop %v596
        %v598 = vsel %vm355, %v591, 0.0
        %v599 = vsel %vm356, %v593, 0.0
        %v600 = vsel %vm357, %v595, 0.0
        %v601 = vsel %vm358, %v597, 0.0
        %v602 = vsel %vm375, %v598, 0.0
        %603 = vadd.xlane.f32.xlu0 %v602
        %v604 = vpop.xlane.xlu0 %603
        %v605 = vsel %vm375, %v599, 0.0
        %606 = vadd.xlane.f32.xlu0 %v605
        %v607 = vpop.xlane.xlu0 %606
        %v608 = vsel %vm375, %v600, 0.0
        %609 = vadd.xlane.f32.xlu0 %v608
        %v610 = vpop.xlane.xlu0 %609
        %v611 = vsel %vm375, %v601, 0.0
        %612 = vadd.xlane.f32.xlu0 %v611
        %v613 = vpop.xlane.xlu0 %612
        %v614 = vadd.f32 %v604, 1e-09
        %v615 = vadd.f32 %v607, 1e-09
        %v616 = vadd.f32 %v610, 1e-09
        %v617 = vadd.f32 %v613, 1e-09
        %v618 = vrcp.pop %v614
        %v619 = vrcp.pop %v615
        %v620 = vrcp.pop %v616
        %v621 = vrcp.pop %v617
        %v622 = vmul.f32 %v598, %v618
        %v623 = vmul.f32 %v599, %v619
        %v624 = vmul.f32 %v600, %v620
        %v625 = vmul.f32 %v601, %v621
        %v627 = vsel %vm375, %v622, 0
        %v630 = vsel %vm375, %v623, 0
        %v633 = vsel %vm375, %v624, 0
        %v636 = vsel %vm375, %v625, 0
        %638 = vmatprep.subr.mxu0 0.0
        %639 = vmatpush1.msra.mxu0 %v367
        %640 = vmatprep.subr.mxu0 0.0
        %641 = vmatpush1.msra.mxu0 %v368
        %642 = vmatprep.subr.mxu0 0.0
        %643 = vmatpush1.msra.mxu0 %v369
        %644 = vmatprep.subr.mxu0 0.0
        %645 = vmatpush1.msra.mxu0 %v370
        %646 = vmatprep.subr.mxu0 0.0
        %647 = vmatpush1.msra.mxu0 0.0
        %648 = vmatprep.subr.mxu0 0.0
        %649 = vmatpush1.msra.mxu0 0.0
        %650 = vmatprep.subr.mxu0 0.0
        %651 = vmatpush1.msra.mxu0 0.0
        %652 = vmatprep.subr.mxu0 0.0
        %653 = vmatpush1.msra.mxu0 0.0
        %654 = vmatprep.subr.mxu0 0.0
        %655 = vmatpush1.msra.mxu0 0.0
        %656 = vmatprep.subr.mxu0 0.0
        %657 = vmatpush1.msra.mxu0 0.0
        %658 = vmatprep.subr.mxu0 0.0
        %659 = vmatpush1.msra.mxu0 0.0
        %660 = vmatprep.subr.mxu0 0.0
        %661 = vmatpush1.msra.mxu0 0.0
        %662 = vmatprep.subr.mxu0 0.0
        %663 = vmatpush1.msra.mxu0 0.0
        %664 = vmatprep.subr.mxu0 0.0
        %665 = vmatpush1.msra.mxu0 0.0
        %666 = vmatprep.subr.mxu0 0.0
        %667 = vmatpush1.msra.mxu0 0.0
        %668 = vmatprep.subr.mxu0 0.0
        %669 = vmatpush1.msra.mxu0 0.0
        %670 = vmatprep.subr.mxu0 0.0
        %671 = vmatpush1.msra.mxu0 0.0
        %672 = vmatprep.subr.mxu0 0.0
        %673 = vmatpush1.msra.mxu0 0.0
        %674 = vmatprep.subr.mxu0 0.0
        %675 = vmatpush1.msra.mxu0 0.0
        %676 = vmatprep.subr.mxu0 0.0
        %677 = vmatpush1.msra.mxu0 0.0
        %678 = vmatprep.subr.mxu0 0.0
        %679 = vmatpush1.msra.mxu0 0.0
        %680 = vmatprep.subr.mxu0 0.0
        %681 = vmatpush1.msra.mxu0 0.0
        %682 = vmatprep.subr.mxu0 0.0
        %683 = vmatpush1.msra.mxu0 0.0
        %684 = vmatprep.subr.mxu0 0.0
        %685 = vmatpush1.msra.mxu0 0.0
        %686 = vmatprep.subr.mxu0 0.0
        %687 = vmatpush1.msra.mxu0 0.0
        %688 = vmatprep.subr.mxu0 0.0
        %689 = vmatpush1.msra.mxu0 0.0
        %690 = vmatprep.subr.mxu0 0.0
        %691 = vmatpush1.msra.mxu0 0.0
        %692 = vmatprep.subr.mxu0 0.0
        %693 = vmatpush1.msra.mxu0 0.0
        %694 = vmatprep.subr.mxu0 0.0
        %695 = vmatpush1.msra.mxu0 0.0
        %696 = vmatprep.subr.mxu0 0.0
        %697 = vmatpush1.msra.mxu0 0.0
        %698 = vmatprep.subr.mxu0 0.0
        %699 = vmatpush1.msra.mxu0 0.0
        %700 = vmatprep.subr.mxu0 0.0
        %701 = vmatpush1.msra.mxu0 0.0
        %702 = vmatprep.mubr.f32.mxu0 0.0
        %703 = vmatmul.mubr.f32.gmra.mrb[0].mxu0 %v627
        %v704 = vpop.f32.mrb[0].mxu0
        %v705 = vadd.f32 0.0, %v704
        %v706 = vpop.f32.mrb[0].mxu0
        %707 = vmatprep.mubr.f32.mxu0 0.0
        %708 = vmatmul.mubr.f32.gmra.mrb[0].mxu0 %v630
        %v709 = vpop.f32.mrb[0].mxu0
        %v710 = vadd.f32 0.0, %v709
        %v711 = vpop.f32.mrb[0].mxu0
        %712 = vmatprep.mubr.f32.mxu0 0.0
        %713 = vmatmul.mubr.f32.gmra.mrb[0].mxu0 %v633
        %v714 = vpop.f32.mrb[0].mxu0
        %v715 = vadd.f32 0.0, %v714
        %v716 = vpop.f32.mrb[0].mxu0
        %717 = vmatprep.mubr.f32.mxu0 0.0
        %718 = vmatmul.mubr.f32.gmra.mrb[0].mxu0 %v636
        %v719 = vpop.f32.mrb[0].mxu0
        %v720 = vadd.f32 0.0, %v719
        %v721 = vpop.f32.mrb[0].mxu0
        %722 = vdwg.mxu0
        %s723 = scalar_lea.vmem [#allocation5], 32
        %v724 = vld [vmem:[%s723] sm:$0xff]
        %v725 = vld [vmem:[%s723 + $0x8] sm:$0xff]
        %v726 = vld [vmem:[%s723 + $0x10] sm:$0xff]
        %v727 = vld [vmem:[%s723 + $0x18] sm:$0xff]
        %v729 = vsel %vm375, %v705, 0
        %v732 = vsel %vm375, %v710, 0
        %v735 = vsel %vm375, %v715, 0
        %v738 = vsel %vm375, %v720, 0
        %740 = vmatprep.subr.mxu0 0.0
        %741 = vmatpush1.msra.mxu0 %v724
        %742 = vmatprep.subr.mxu0 0.0
        %743 = vmatpush1.msra.mxu0 %v725
        %744 = vmatprep.subr.mxu0 0.0
        %745 = vmatpush1.msra.mxu0 %v726
        %746 = vmatprep.subr.mxu0 0.0
        %747 = vmatpush1.msra.mxu0 %v727
        %748 = vmatprep.subr.mxu0 0.0
        %749 = vmatpush1.msra.mxu0 0.0
        %750 = vmatprep.subr.mxu0 0.0
        %751 = vmatpush1.msra.mxu0 0.0
        %752 = vmatprep.subr.mxu0 0.0
        %753 = vmatpush1.msra.mxu0 0.0
        %754 = vmatprep.subr.mxu0 0.0
        %755 = vmatpush1.msra.mxu0 0.0
        %756 = vmatprep.subr.mxu0 0.0
        %757 = vmatpush1.msra.mxu0 0.0
        %758 = vmatprep.subr.mxu0 0.0
        %759 = vmatpush1.msra.mxu0 0.0
        %760 = vmatprep.subr.mxu0 0.0
        %761 = vmatpush1.msra.mxu0 0.0
        %762 = vmatprep.subr.mxu0 0.0
        %763 = vmatpush1.msra.mxu0 0.0
        %764 = vmatprep.subr.mxu0 0.0
        %765 = vmatpush1.msra.mxu0 0.0
        %766 = vmatprep.subr.mxu0 0.0
        %767 = vmatpush1.msra.mxu0 0.0
        %768 = vmatprep.subr.mxu0 0.0
        %769 = vmatpush1.msra.mxu0 0.0
        %770 = vmatprep.subr.mxu0 0.0
        %771 = vmatpush1.msra.mxu0 0.0
        %772 = vmatprep.subr.mxu0 0.0
        %773 = vmatpush1.msra.mxu0 0.0
        %774 = vmatprep.subr.mxu0 0.0
        %775 = vmatpush1.msra.mxu0 0.0
        %776 = vmatprep.subr.mxu0 0.0
        %777 = vmatpush1.msra.mxu0 0.0
        %778 = vmatprep.subr.mxu0 0.0
        %779 = vmatpush1.msra.mxu0 0.0
        %780 = vmatprep.subr.mxu0 0.0
        %781 = vmatpush1.msra.mxu0 0.0
        %782 = vmatprep.subr.mxu0 0.0
        %783 = vmatpush1.msra.mxu0 0.0
        %784 = vmatprep.subr.mxu0 0.0
        %785 = vmatpush1.msra.mxu0 0.0
        %786 = vmatprep.subr.mxu0 0.0
        %787 = vmatpush1.msra.mxu0 0.0
        %788 = vmatprep.subr.mxu0 0.0
        %789 = vmatpush1.msra.mxu0 0.0
        %790 = vmatprep.subr.mxu0 0.0
        %791 = vmatpush1.msra.mxu0 0.0
        %792 = vmatprep.subr.mxu0 0.0
        %793 = vmatpush1.msra.mxu0 0.0
        %794 = vmatprep.subr.mxu0 0.0
        %795 = vmatpush1.msra.mxu0 0.0
        %796 = vmatprep.subr.mxu0 0.0
        %797 = vmatpush1.msra.mxu0 0.0
        %798 = vmatprep.subr.mxu0 0.0
        %799 = vmatpush1.msra.mxu0 0.0
        %800 = vmatprep.subr.mxu0 0.0
        %801 = vmatpush1.msra.mxu0 0.0
        %802 = vmatprep.subr.mxu0 0.0
        %803 = vmatpush1.msra.mxu0 0.0
        %804 = vmatprep.mubr.f32.mxu0 0.0
        %805 = vmatmul.mubr.f32.gmra.mrb[0].mxu0 %v729
        %v806 = vpop.f32.mrb[0].mxu0
        %v807 = vadd.f32 0.0, %v806
        %v808 = vpop.f32.mrb[0].mxu0
        %809 = vmatprep.mubr.f32.mxu0 0.0
        %810 = vmatmul.mubr.f32.gmra.mrb[0].mxu0 %v732
        %v811 = vpop.f32.mrb[0].mxu0
        %v812 = vadd.f32 0.0, %v811
        %v813 = vpop.f32.mrb[0].mxu0
        %814 = vmatprep.mubr.f32.mxu0 0.0
        %815 = vmatmul.mubr.f32.gmra.mrb[0].mxu0 %v735
        %v816 = vpop.f32.mrb[0].mxu0
        %v817 = vadd.f32 0.0, %v816
        %v818 = vpop.f32.mrb[0].mxu0
        %819 = vmatprep.mubr.f32.mxu0 0.0
        %820 = vmatmul.mubr.f32.gmra.mrb[0].mxu0 %v738
        %v821 = vpop.f32.mrb[0].mxu0
        %v822 = vadd.f32 0.0, %v821
        %v823 = vpop.f32.mrb[0].mxu0
        %824 = vdwg.mxu0
        %v825 = vadd.f32 %v367, %v807
        %v826 = vadd.f32 %v368, %v812
        %v827 = vadd.f32 %v369, %v817
        %v828 = vadd.f32 %v370, %v822
        %v829 = vcvt.s32.f32 %v359
        %v830 = vcvt.s32.f32 %v360
        %v831 = vcvt.s32.f32 %v361
        %v832 = vcvt.s32.f32 %v362
        %v833 = vsub.f32 %v825, %v308
        %v834 = vsub.f32 %v826, %v309
        %v835 = vsub.f32 %v827, %v310
        %v836 = vsub.f32 %v828, %v311
        %v837 = vmul.f32 %v833, %v829
        %v838 = vmul.f32 %v834, %v830
        %v839 = vmul.f32 %v835, %v831
        %v840 = vmul.f32 %v836, %v832
        %v841 = vmul.f32 %v837, %v837
        %v842 = vmul.f32 %v838, %v838
        %v843 = vmul.f32 %v839, %v839
        %v844 = vmul.f32 %v840, %v840
        %v845 = vsel %vm375, %v841, 0.0
        %846 = vadd.xlane.f32.xlu0 %v845
        %v847 = vpop.xlane.xlu0 %846
        %v848 = vsel %vm375, %v842, 0.0
        %849 = vadd.xlane.f32.xlu0 %v848
        %v850 = vpop.xlane.xlu0 %849
        %v851 = vsel %vm375, %v843, 0.0
        %852 = vadd.xlane.f32.xlu0 %v851
        %v853 = vpop.xlane.xlu0 %852
        %v854 = vsel %vm375, %v844, 0.0
        %855 = vadd.xlane.f32.xlu0 %v854
        %v856 = vpop.xlane.xlu0 %855
        %v857 = vadd.f32 %v847, %v850
        %v858 = vadd.f32 %v857, %v853
        %v859 = vadd.f32 %v858, %v856
        %v860 = vrot.slane %v859, 4
        %v861 = vadd.f32 %v859, %v860
        %v862 = vrot.slane %v861, 2
        %v863 = vadd.f32 %v861, %v862
        %v864 = vrot.slane %v863, 1
        %v865 = vadd.f32 %v863, %v864
        %v866 = vadd.f32 %v829, %v830
        %v867 = vadd.f32 %v866, %v831
        %v868 = vadd.f32 %v867, %v832
        %v869 = vrot.slane %v868, 4
        %v870 = vadd.f32 %v868, %v869
        %v871 = vrot.slane %v870, 2
        %v872 = vadd.f32 %v870, %v871
        %v873 = vrot.slane %v872, 1
        %v874 = vadd.f32 %v872, %v873
        %v875 = vmul.f32 %v874, 32.0
        %v876 = vadd.f32 %v875, 1e-08
        %v877 = vrcp.pop %v876
        %v878 = vmul.f32 %v865, %v877
        %v879 = vld [vmem:[%s3] sm:$0x1]
        %v880 = vld [vmem:[%s3 + $0x1] sm:$0x1]
        %v881 = vld [vmem:[%s3 + $0x2] sm:$0x1]
        %s882 = scalar_lea.vmem [#allocation5], 64
        %v883 = vld [vmem:[%s882] sm:$0xff]
        %v884 = vld [vmem:[%s882 + $0x8] sm:$0xff]
        %v885 = vld [vmem:[%s882 + $0x10] sm:$0xff]
        %v886 = vld [vmem:[%s882 + $0x18] sm:$0xff]
        %v887 = vlaneseq
        %v888 = vshrl.u32 %v887, 7
        %v889 = vsub.s32 0, %v888
        %v890 = vrot.slane %v879, %v889
        %v892 = vsel %vm375, %v825, 0
        %v895 = vsel %vm375, %v826, 0
        %v898 = vsel %vm375, %v827, 0
        %v901 = vsel %vm375, %v828, 0
        %903 = vmatprep.subr.mxu0 0.0
        %904 = vmatpush1.msra.mxu0 %v883
        %905 = vmatprep.subr.mxu0 0.0
        %906 = vmatpush1.msra.mxu0 %v884
        %907 = vmatprep.subr.mxu0 0.0
        %908 = vmatpush1.msra.mxu0 %v885
        %909 = vmatprep.subr.mxu0 0.0
        %910 = vmatpush1.msra.mxu0 %v886
        %911 = vmatprep.subr.mxu0 0.0
        %912 = vmatpush1.msra.mxu0 0.0
        %913 = vmatprep.subr.mxu0 0.0
        %914 = vmatpush1.msra.mxu0 0.0
        %915 = vmatprep.subr.mxu0 0.0
        %916 = vmatpush1.msra.mxu0 0.0
        %917 = vmatprep.subr.mxu0 0.0
        %918 = vmatpush1.msra.mxu0 0.0
        %919 = vmatprep.subr.mxu0 0.0
        %920 = vmatpush1.msra.mxu0 0.0
        %921 = vmatprep.subr.mxu0 0.0
        %922 = vmatpush1.msra.mxu0 0.0
        %923 = vmatprep.subr.mxu0 0.0
        %924 = vmatpush1.msra.mxu0 0.0
        %925 = vmatprep.subr.mxu0 0.0
        %926 = vmatpush1.msra.mxu0 0.0
        %927 = vmatprep.subr.mxu0 0.0
        %928 = vmatpush1.msra.mxu0 0.0
        %929 = vmatprep.subr.mxu0 0.0
        %930 = vmatpush1.msra.mxu0 0.0
        %931 = vmatprep.subr.mxu0 0.0
        %932 = vmatpush1.msra.mxu0 0.0
        %933 = vmatprep.subr.mxu0 0.0
        %934 = vmatpush1.msra.mxu0 0.0
        %935 = vmatprep.subr.mxu0 0.0
        %936 = vmatpush1.msra.mxu0 0.0
        %937 = vmatprep.subr.mxu0 0.0
        %938 = vmatpush1.msra.mxu0 0.0
        %939 = vmatprep.subr.mxu0 0.0
        %940 = vmatpush1.msra.mxu0 0.0
        %941 = vmatprep.subr.mxu0 0.0
        %942 = vmatpush1.msra.mxu0 0.0
        %943 = vmatprep.subr.mxu0 0.0
        %944 = vmatpush1.msra.mxu0 0.0
        %945 = vmatprep.subr.mxu0 0.0
        %946 = vmatpush1.msra.mxu0 0.0
        %947 = vmatprep.subr.mxu0 0.0
        %948 = vmatpush1.msra.mxu0 0.0
        %949 = vmatprep.subr.mxu0 0.0
        %950 = vmatpush1.msra.mxu0 0.0
        %951 = vmatprep.subr.mxu0 0.0
        %952 = vmatpush1.msra.mxu0 0.0
        %953 = vmatprep.subr.mxu0 0.0
        %954 = vmatpush1.msra.mxu0 0.0
        %955 = vmatprep.subr.mxu0 0.0
        %956 = vmatpush1.msra.mxu0 0.0
        %957 = vmatprep.subr.mxu0 0.0
        %958 = vmatpush1.msra.mxu0 0.0
        %959 = vmatprep.subr.mxu0 0.0
        %960 = vmatpush1.msra.mxu0 0.0
        %961 = vmatprep.subr.mxu0 0.0
        %962 = vmatpush1.msra.mxu0 0.0
        %963 = vmatprep.subr.mxu0 0.0
        %964 = vmatpush1.msra.mxu0 0.0
        %965 = vmatprep.subr.mxu0 0.0
        %966 = vmatpush1.msra.mxu0 0.0
        %967 = vmatprep.mubr.f32.mxu0 0.0
        %968 = vmatmul.mubr.f32.gmra.mrb[0].mxu0 %v892
        %v969 = vpop.f32.mrb[0].mxu0
        %v970 = vadd.f32 %v890, %v969
        %v971 = vpop.f32.mrb[0].mxu0
        %972 = vmatprep.mubr.f32.mxu0 0.0
        %973 = vmatmul.mubr.f32.gmra.mrb[0].mxu0 %v895
        %v974 = vpop.f32.mrb[0].mxu0
        %v975 = vadd.f32 %v890, %v974
        %v976 = vpop.f32.mrb[0].mxu0
        %977 = vmatprep.mubr.f32.mxu0 0.0
        %978 = vmatmul.mubr.f32.gmra.mrb[0].mxu0 %v898
        %v979 = vpop.f32.mrb[0].mxu0
        %v980 = vadd.f32 %v890, %v979
        %v981 = vpop.f32.mrb[0].mxu0
        %982 = vmatprep.mubr.f32.mxu0 0.0
        %983 = vmatmul.mubr.f32.gmra.mrb[0].mxu0 %v901
        %v984 = vpop.f32.mrb[0].mxu0
        %v985 = vadd.f32 %v890, %v984
        %v986 = vpop.f32.mrb[0].mxu0
        %987 = vdwg.mxu0
        %v988 = vmax.f32 %v970, 0.0
        %v989 = vmax.f32 %v975, 0.0
        %v990 = vmax.f32 %v980, 0.0
        %v991 = vmax.f32 %v985, 0.0
        %993 = vset.pattern.permute.xlu0 0
        %994 = vperm.xlu0 %993, %v881
        %v995 = vpop.permute.xlu0 %994
        %v998 = vsel %vm375, %v880, 0
        %v1001 = vsel %vm375, %v988, 0
        %v1004 = vsel %vm375, %v989, 0
        %v1007 = vsel %vm375, %v990, 0
        %v1010 = vsel %vm375, %v991, 0
        %1012 = vmatprep.subr.mxu0 0.0
        %1013 = vmatpush1.xpose.msra.mxu0 %v1001
        %1014 = vmatprep.subr.mxu0 0.0
        %1015 = vmatpush1.xpose.msra.mxu0 %v1004
        %1016 = vmatprep.subr.mxu0 0.0
        %1017 = vmatpush1.xpose.msra.mxu0 %v1007
        %1018 = vmatprep.subr.mxu0 0.0
        %1019 = vmatpush1.xpose.msra.mxu0 %v1010
        %1020 = vmatprep.subr.mxu0 0.0
        %1021 = vmatpush1.xpose.msra.mxu0 0.0
        %1022 = vmatprep.subr.mxu0 0.0
        %1023 = vmatpush1.xpose.msra.mxu0 0.0
        %1024 = vmatprep.subr.mxu0 0.0
        %1025 = vmatpush1.xpose.msra.mxu0 0.0
        %1026 = vmatprep.subr.mxu0 0.0
        %1027 = vmatpush1.xpose.msra.mxu0 0.0
        %1028 = vmatprep.subr.mxu0 0.0
        %1029 = vmatpush1.xpose.msra.mxu0 0.0
        %1030 = vmatprep.subr.mxu0 0.0
        %1031 = vmatpush1.xpose.msra.mxu0 0.0
        %1032 = vmatprep.subr.mxu0 0.0
        %1033 = vmatpush1.xpose.msra.mxu0 0.0
        %1034 = vmatprep.subr.mxu0 0.0
        %1035 = vmatpush1.xpose.msra.mxu0 0.0
        %1036 = vmatprep.subr.mxu0 0.0
        %1037 = vmatpush1.xpose.msra.mxu0 0.0
        %1038 = vmatprep.subr.mxu0 0.0
        %1039 = vmatpush1.xpose.msra.mxu0 0.0
        %1040 = vmatprep.subr.mxu0 0.0
        %1041 = vmatpush1.xpose.msra.mxu0 0.0
        %1042 = vmatprep.subr.mxu0 0.0
        %1043 = vmatpush1.xpose.msra.mxu0 0.0
        %1044 = vmatprep.subr.mxu0 0.0
        %1045 = vmatpush1.xpose.msra.mxu0 0.0
        %1046 = vmatprep.subr.mxu0 0.0
        %1047 = vmatpush1.xpose.msra.mxu0 0.0
        %1048 = vmatprep.subr.mxu0 0.0
        %1049 = vmatpush1.xpose.msra.mxu0 0.0
        %1050 = vmatprep.subr.mxu0 0.0
        %1051 = vmatpush1.xpose.msra.mxu0 0.0
        %1052 = vmatprep.subr.mxu0 0.0
        %1053 = vmatpush1.xpose.msra.mxu0 0.0
        %1054 = vmatprep.subr.mxu0 0.0
        %1055 = vmatpush1.xpose.msra.mxu0 0.0
        %1056 = vmatprep.subr.mxu0 0.0
        %1057 = vmatpush1.xpose.msra.mxu0 0.0
        %1058 = vmatprep.subr.mxu0 0.0
        %1059 = vmatpush1.xpose.msra.mxu0 0.0
        %1060 = vmatprep.subr.mxu0 0.0
        %1061 = vmatpush1.xpose.msra.mxu0 0.0
        %1062 = vmatprep.subr.mxu0 0.0
        %1063 = vmatpush1.xpose.msra.mxu0 0.0
        %1064 = vmatprep.subr.mxu0 0.0
        %1065 = vmatpush1.xpose.msra.mxu0 0.0
        %1066 = vmatprep.subr.mxu0 0.0
        %1067 = vmatpush1.xpose.msra.mxu0 0.0
        %1068 = vmatprep.subr.mxu0 0.0
        %1069 = vmatpush1.xpose.msra.mxu0 0.0
        %1070 = vmatprep.subr.mxu0 0.0
        %1071 = vmatpush1.xpose.msra.mxu0 0.0
        %1072 = vmatprep.subr.mxu0 0.0
        %1073 = vmatpush1.xpose.msra.mxu0 0.0
        %1074 = vmatprep.subr.mxu0 0.0
        %1075 = vmatpush1.xpose.msra.mxu0 0.0
        %1076 = vmatprep.mubr.f32.mxu0 0.0
        %1077 = vmatmul.mubr.f32.gmra.mrb[0].mxu0 %v998
        %v1078 = vpop.f32.mrb[0].mxu0
        %v1079 = vadd.f32 %v995, %v1078
        %v1080 = vpop.f32.mrb[0].mxu0
        %1081 = vdwg.mxu0
        %v1082 = vsel %vm375, %v1079, %v878
        %vm1083 = vcmask 262144
        %1084 = vst.msk [vmem:[%s168] sm:$0x1] %vm1083, %v1082
        %p1085 = scmp.lt.s32.totalorder %s22, 7
        %s1086 = scalar_select %p1085, %s22, 7
        %s1087 = scalar_lea.vmem %s4, %s1086
        // Predicated region
        $region41: #{batched_forward.1} parent=31 // pred_check
          %p1088 = pneg %p103
        $region42: #{batched_forward.1} parent=31 // pred_check_branch
          %1090 = sbr.rel (%p1088) target = $region44
        $region43: #{batched_forward.1} parent=31 // pred_region
          _
        $region44: #{batched_forward.1} parent=31 // pred_fallthru
          _
      $region32: #{batched_forward.1} parent=5 // pred_fallthru
        _
      %p1091 = scmp.le.s32.totalorder 2, %s17
      // Predicated region
      $region45: #{batched_forward.1} parent=5 // pred_check
        %p1092 = pneg %p1091
      $region46: #{batched_forward.1} parent=5 // pred_check_branch
        %1094 = sbr.rel (%p1092) target = $region48
      $region47: #{batched_forward.1} parent=5 // pred_region
        %s1095 = ssub.s32 %s17, 2
        // Predicated region
        $region49: #{batched_forward.1} parent=47 // pred_check
          %p1096 = pneg %p109
        $region50: #{batched_forward.1} parent=47 // pred_check_branch
          %1098 = sbr.rel (%p1096) target = $region52
        $region51: #{batched_forward.1} parent=47 // pred_region
          %p1099 = scmp.lt.s32.totalorder %s23, 7
          %s1100 = scalar_select %p1099, %s23, 7
          %s1101 = scalar_lea.vmem %s4, %s1100
        $region52: #{batched_forward.1} parent=47 // pred_fallthru
          _
      $region48: #{batched_forward.1} parent=5 // pred_fallthru
        _
    $region6: #{batched_forward.1} parent=1 // loop_footer
      %s21 = sadd.s32 1, %s17
    $region7: #{batched_forward.1} parent=1 // loop_footer_branch
      %16 = sbr.rel target = $region3
    $region8: #{batched_forward.1} parent=1 // loop_exit
      _
    %1102 = vsyncpa [#allocation6], 1
    %s1103 = scalar_lea.sflag [#allocation6], 1
    %1104 = vsyncpa %s1103, 1

</llo_original>
